<compile_context>
chip_gen: v7x
topology: tpu7x:2x2x1
jax: 0.10.0
libtpu: 0.0.40
codegen_flags: <defaults>
</compile_context>

<pallas_src>
import functools

import numpy as np
import jax
import jax.numpy as jnp
from jax.experimental import pallas as pl
from jax.experimental.pallas import tpu as pltpu


# --------------------------------------------------------------------------- #
# Fused kernel
# --------------------------------------------------------------------------- #
def _mrp_fused_kernel(*refs, num_layers, grid_vals, denom, eps, matmul_dtype,
                      exact_rbf):
    """All MRP layers on a (TM, D0) tile of rows.

    refs = [x_ref, (ln_w, ln_b, w_all, bias) * num_layers, o_ref]
    """
    x_ref = refs[0]
    o_ref = refs[-1]
    layer_refs = refs[1:-1]

    h = x_ref[...].astype(jnp.float32)                      # (TM, D0)
    inv_denom = 1.0 / denom
    G = len(grid_vals)
    step = (grid_vals[1] - grid_vals[0]) if G > 1 else 0.0
    r = step * inv_denom                                    # grid spacing / denominator
    q = float(np.exp(-2.0 * r * r))                         # per-step geometric factor

    for l in range(num_layers):
        lnw_ref, lnb_ref, w_ref, b_ref = layer_refs[4 * l: 4 * l + 4]

        # --- LayerNorm over the feature (lane) axis, biased variance ---
        mean = jnp.mean(h, axis=-1, keepdims=True)
        xc = h - mean
        var = jnp.mean(xc * xc, axis=-1, keepdims=True)
        hn = xc * jax.lax.rsqrt(var + eps) * lnw_ref[...] + lnb_ref[...]

        # --- RBF expansion (grid-major blocks) ---
        if exact_rbf or G <= 2:
            # Direct form: one EUP exp per grid point (matches reference exactly).
            blocks = [jnp.exp(-jnp.square((hn - g) * inv_denom)) for g in grid_vals]
        else:
            # Geometric recurrence anchored at the middle grid point: 3 exps total,
            # remaining blocks are VPU multiplies (EUP -> VALU rebalance).
            #   block_{k+1} = block_k * up * q^(k-m),  block_{k-1} = block_k * dn * q^(m-1-k)
            # NOTE: if the anchor underflows (|hn - g_mid| > ~5.8*denom, impossible
            # right after LayerNorm) far blocks would flush to 0; use exact_rbf=True
            # if inputs can be that far outside the grid.
            m = G // 2
            zm = (hn - grid_vals[m]) * inv_denom
            blocks = [None] * G
            blocks[m] = jnp.exp(-(zm * zm))
            up = jnp.exp((2.0 * r) * zm - r * r)
            dn = jnp.exp((-2.0 * r) * zm - r * r)
            cur = blocks[m]
            for j, k in enumerate(range(m + 1, G)):
                cur = cur * up
                if j > 0:
                    cur = cur * (q ** j)
                blocks[k] = cur
            cur = blocks[m]
            for j, k in enumerate(range(m - 1, -1, -1)):
                cur = cur * dn
                if j > 0:
                    cur = cur * (q ** j)
                blocks[k] = cur

        # --- SiLU base path on the pre-norm activation ---
        blocks.append(h * jax.nn.sigmoid(h))                # (TM, Din)
        feats = jnp.concatenate(blocks, axis=-1).astype(matmul_dtype)  # (TM, (G+1)*Din)

        # --- single MXU matmul per layer, f32 accumulation ---
        h = jnp.dot(feats, w_ref[...], preferred_element_type=jnp.float32)
        h = h + b_ref[...]                                   # (TM, Dout)

    o_ref[...] = h.astype(o_ref.dtype)


# --------------------------------------------------------------------------- #
# Host-side parameter packing (one-time transform)
# --------------------------------------------------------------------------- #
def pack_mrp_params(params, num_grids, matmul_dtype):
    """Pack PyTorch-layout params into the kernel's fused-matmul layout."""
    packed = []
    for (ln_w, ln_b, sw, bw, bb) in params:
        din = ln_w.shape[0]
        dout = bw.shape[0]
        # PyTorch spline weight columns are indexed din*G + g (flatten of (..., Din, G));
        # the kernel builds features grid-major (g*Din + din), so reorder accordingly,
        # then append the base nn.Linear rows so each layer is a single matmul.
        w_spline = jnp.transpose(sw.reshape(dout, din, num_grids), (2, 1, 0))
        w_spline = w_spline.reshape(num_grids * din, dout)
        w_all = jnp.concatenate([w_spline, bw.T], axis=0).astype(matmul_dtype)
        packed.append((ln_w.reshape(1, din).astype(jnp.float32),
                       ln_b.reshape(1, din).astype(jnp.float32),
                       w_all,                                 # ((G+1)*Din, Dout)
                       bb.reshape(1, dout).astype(jnp.float32)))
    return packed


def _round_up(n, m):
    return ((n + m - 1) // m) * m


# --------------------------------------------------------------------------- #
# Wrapper
# --------------------------------------------------------------------------- #
def mrp_forward(x, params, *, grid_min=-2.0, grid_max=2.0, num_grids=8,
                eps=1e-5, tm=512, matmul_dtype=jnp.bfloat16, exact_rbf=False):
    """Fused MRP forward.  x: (..., Din0) -> (..., DoutL)."""
    grid_vals = np.linspace(grid_min, grid_max, num_grids)
    denom = (grid_max - grid_min) / (num_grids - 1)

    lead = x.shape[:-1]
    x2d = x.reshape(-1, x.shape[-1]).astype(jnp.float32)
    n, d0 = x2d.shape

    # In production pack once and reuse; done per call here for simplicity.
    packed = pack_mrp_params(params, num_grids, matmul_dtype)
    num_layers = len(packed)
    d_out = packed[-1][3].shape[-1]

    # Row tiling: tile multiple of 8; keep >= 2 grid steps when N allows so both
    # v7x TensorCores get work; pad N once (not per layer).
    n8 = _round_up(max(n, 8), 8)
    tm_eff = min(tm, n8)
    if n8 >= 512:
        tm_eff = min(tm_eff, _round_up((n8 + 1) // 2, 8))
    n_tot = _round_up(n, tm_eff)
    if n_tot != n:
        x2d = jnp.pad(x2d, ((0, n_tot - n), (0, 0)))

    in_specs = [pl.BlockSpec((tm_eff, d0), lambda i: (i, 0))]
    flat_inputs = [x2d]
    for (lnw, lnb, w_all, b) in packed:
        # Constant index maps: weights are fetched once and stay VMEM-resident
        # across the whole (parallel) row grid.
        in_specs += [pl.BlockSpec(lnw.shape, lambda i: (0, 0)),
                     pl.BlockSpec(lnb.shape, lambda i: (0, 0)),
                     pl.BlockSpec(w_all.shape, lambda i: (0, 0)),
                     pl.BlockSpec(b.shape, lambda i: (0, 0))]
        flat_inputs += [lnw, lnb, w_all, b]

    kernel = functools.partial(
        _mrp_fused_kernel,
        num_layers=num_layers,
        grid_vals=tuple(float(v) for v in grid_vals),
        denom=float(denom),
        eps=float(eps),
        matmul_dtype=matmul_dtype,
        exact_rbf=exact_rbf,
    )

    out = pl.pallas_call(
        kernel,
        out_shape=jax.ShapeDtypeStruct((n_tot, d_out), jnp.float32),
        grid_spec=pltpu.PrefetchScalarGridSpec(
            num_scalar_prefetch=0,
            grid=(n_tot // tm_eff,),
            in_specs=in_specs,
            out_specs=pl.BlockSpec((tm_eff, d_out), lambda i: (i, 0)),
        ),
        compiler_params=pltpu.CompilerParams(
            dimension_semantics=("parallel",)),
    )(*flat_inputs)

    return out[:n].reshape(*lead, d_out)


# --------------------------------------------------------------------------- #
# Synthetic parameters (PyTorch-native layout) and pure-JAX reference
# --------------------------------------------------------------------------- #
def init_mrp_params(key, layer_dims, num_grids=8, spline_init_scale=0.1):
    """ln_w (Din,), ln_b (Din,), spline_w (Dout, Din*G), base_w (Dout, Din), base_b (Dout,)."""
    params = []
    for din, dout in zip(layer_dims[:-1], layer_dims[1:]):
        key, k_sw, k_bw, k_bb = jax.random.split(key, 4)
        ln_w = jnp.ones((din,), jnp.float32)
        ln_b = jnp.zeros((din,), jnp.float32)
        sw = (jax.random.truncated_normal(k_sw, -2.0, 2.0, (dout, din * num_grids),
                                          jnp.float32) * spline_init_scale)
        bound = 1.0 / np.sqrt(din)
        bw = jax.random.uniform(k_bw, (dout, din), jnp.float32, -bound, bound)
        bb = jax.random.uniform(k_bb, (dout,), jnp.float32, -bound, bound)
        params.append((ln_w, ln_b, sw, bw, bb))
    return params


def mrp_reference(x, params, *, grid_min=-2.0, grid_max=2.0, num_grids=8, eps=1e-5):
    """Pure-JAX reference matching the PyTorch module semantics."""
    grid_vals = jnp.asarray(np.linspace(grid_min, grid_max, num_grids), jnp.float32)
    denom = (grid_max - grid_min) / (num_grids - 1)
    h = x.astype(jnp.float32)
    for (ln_w, ln_b, sw, bw, bb) in params:
        mean = jnp.mean(h, axis=-1, keepdims=True)
        var = jnp.mean((h - mean) ** 2, axis=-1, keepdims=True)
        hn = (h - mean) * jax.lax.rsqrt(var + eps) * ln_w + ln_b
        basis = jnp.exp(-(((hn[..., None] - grid_vals) / denom) ** 2))   # (..., Din, G)
        flat = basis.reshape(*basis.shape[:-2], -1)                      # din-major, grid-minor
        y = flat @ sw.T + (h * jax.nn.sigmoid(h)) @ bw.T + bb
        h = y
    return h


if __name__ == "__main__":
    key = jax.random.PRNGKey(0)
    layer_dims = [32, 64, 16]          # MRP(layers=[32, 64, 16])
    num_grids = 8

    k_x, k_x2, k_p = jax.random.split(key, 3)
    params = init_mrp_params(k_p, layer_dims, num_grids=num_grids)

    # Small shape consistent with the module: (batch=2, seq=8, hidden=32).
    x = jax.random.normal(k_x, (2, 8, 32), jnp.float32)
    y_ref = mrp_reference(x, params, num_grids=num_grids)

    # f32-matmul + exact-exp path: tight correctness check.
    y32 = jax.block_until_ready(
        mrp_forward(x, params, num_grids=num_grids, matmul_dtype=jnp.float32,
                    exact_rbf=True))
    np.testing.assert_allclose(np.asarray(y32), np.asarray(y_ref), rtol=1e-4, atol=1e-4)
    assert y32.shape == (2, 8, layer_dims[-1])

    # f32-matmul + recurrence RBF path (default fast path, f32 operands).
    y32r = jax.block_until_ready(
        mrp_forward(x, params, num_grids=num_grids, matmul_dtype=jnp.float32))
    np.testing.assert_allclose(np.asarray(y32r), np.asarray(y_ref), rtol=5e-4, atol=5e-4)

    # Default path: bf16 matmul operands (f32 accumulation) + recurrence RBF.
    ybf = jax.block_until_ready(mrp_forward(x, params, num_grids=num_grids))
    np.testing.assert_allclose(np.asarray(ybf), np.asarray(y_ref), rtol=1e-1, atol=1e-1)

    # Multi-tile + padding path (grid > 1, N not a multiple of the tile).
    x2 = jax.random.normal(k_x2, (3, 333, 32), jnp.float32)
    y2 = jax.block_until_ready(
        mrp_forward(x2, params, num_grids=num_grids, matmul_dtype=jnp.float32, tm=512))
    y2_ref = mrp_reference(x2, params, num_grids=num_grids)
    np.testing.assert_allclose(np.asarray(y2), np.asarray(y2_ref), rtol=5e-4, atol=5e-4)

    print("KERNEL_OK")
</pallas_src>

<mosaic_0001>
module attributes {stable_mosaic.version = 11 : i64} {
  func.func @_mrp_fused_kernel(%arg0: i32, %arg1: memref<16x32xf32, #tpu.memory_space<vmem>>, %arg2: memref<1x32xf32, #tpu.memory_space<vmem>>, %arg3: memref<1x32xf32, #tpu.memory_space<vmem>>, %arg4: memref<288x64xf32, #tpu.memory_space<vmem>>, %arg5: memref<1x64xf32, #tpu.memory_space<vmem>>, %arg6: memref<1x64xf32, #tpu.memory_space<vmem>>, %arg7: memref<1x64xf32, #tpu.memory_space<vmem>>, %arg8: memref<576x16xf32, #tpu.memory_space<vmem>>, %arg9: memref<1x16xf32, #tpu.memory_space<vmem>>, %arg10: memref<16x16xf32, #tpu.memory_space<vmem>>) attributes {dimension_semantics = [#tpu.dimension_semantics<parallel>], iteration_bounds = array<i64: 1>, scalar_prefetch = 0 : i64, scratch_operands = 0 : i64, tpu.core_type = #tpu.core_type<tc>, window_params = [{transform_indices = @transform_0, window_bounds = array<i64: 16, 32>}, {pipeline_mode = #tpu.pipeline_mode<synchronous>, transform_indices = @transform_1, window_bounds = array<i64: 1, 32>}, {pipeline_mode = #tpu.pipeline_mode<synchronous>, transform_indices = @transform_2, window_bounds = array<i64: 1, 32>}, {pipeline_mode = #tpu.pipeline_mode<synchronous>, transform_indices = @transform_3, window_bounds = array<i64: 288, 64>}, {pipeline_mode = #tpu.pipeline_mode<synchronous>, transform_indices = @transform_4, window_bounds = array<i64: 1, 64>}, {pipeline_mode = #tpu.pipeline_mode<synchronous>, transform_indices = @transform_5, window_bounds = array<i64: 1, 64>}, {pipeline_mode = #tpu.pipeline_mode<synchronous>, transform_indices = @transform_6, window_bounds = array<i64: 1, 64>}, {pipeline_mode = #tpu.pipeline_mode<synchronous>, transform_indices = @transform_7, window_bounds = array<i64: 576, 16>}, {pipeline_mode = #tpu.pipeline_mode<synchronous>, transform_indices = @transform_8, window_bounds = array<i64: 1, 16>}, {transform_indices = @transform_9, window_bounds = array<i64: 16, 16>}]} {
    %c0 = arith.constant 0 : index
    %c0_0 = arith.constant 0 : index
    %0 = vector.load %arg1[%c0, %c0_0] : memref<16x32xf32, #tpu.memory_space<vmem>>, vector<16x32xf32>
    %cst = arith.constant dense<0.000000e+00> : vector<16xf32>
    %1 = vector.multi_reduction <add>, %0, %cst [1] : vector<16x32xf32> to vector<16xf32>
    %2 = vector.shape_cast %1 : vector<16xf32> to vector<16x1xf32>
    %cst_1 = arith.constant 3.200000e+01 : f32
    %3 = vector.broadcast %cst_1 : f32 to vector<16x1xf32>
    %4 = arith.divf %2, %3 : vector<16x1xf32>
    %5 = vector.broadcast %4 : vector<16x1xf32> to vector<16x32xf32>
    %6 = arith.subf %0, %5 : vector<16x32xf32>
    %7 = arith.mulf %6, %6 : vector<16x32xf32>
    %cst_2 = arith.constant dense<0.000000e+00> : vector<16xf32>
    %8 = vector.multi_reduction <add>, %7, %cst_2 [1] : vector<16x32xf32> to vector<16xf32>
    %9 = vector.shape_cast %8 : vector<16xf32> to vector<16x1xf32>
    %cst_3 = arith.constant 3.200000e+01 : f32
    %10 = vector.broadcast %cst_3 : f32 to vector<16x1xf32>
    %11 = arith.divf %9, %10 : vector<16x1xf32>
    %cst_4 = arith.constant 9.99999974E-6 : f32
    %12 = vector.broadcast %cst_4 : f32 to vector<16x1xf32>
    %13 = arith.addf %11, %12 : vector<16x1xf32>
    %14 = math.rsqrt %13 : vector<16x1xf32>
    %15 = vector.broadcast %14 : vector<16x1xf32> to vector<16x32xf32>
    %16 = arith.mulf %6, %15 : vector<16x32xf32>
    %c0_5 = arith.constant 0 : index
    %c0_6 = arith.constant 0 : index
    %17 = vector.load %arg2[%c0_5, %c0_6] : memref<1x32xf32, #tpu.memory_space<vmem>>, vector<1x32xf32>
    %18 = vector.broadcast %17 : vector<1x32xf32> to vector<16x32xf32>
    %19 = arith.mulf %16, %18 : vector<16x32xf32>
    %c0_7 = arith.constant 0 : index
    %c0_8 = arith.constant 0 : index
    %20 = vector.load %arg3[%c0_7, %c0_8] : memref<1x32xf32, #tpu.memory_space<vmem>>, vector<1x32xf32>
    %21 = vector.broadcast %20 : vector<1x32xf32> to vector<16x32xf32>
    %22 = arith.addf %19, %21 : vector<16x32xf32>
    %cst_9 = arith.constant -2.000000e+00 : f32
    %23 = vector.broadcast %cst_9 : f32 to vector<16x32xf32>
    %24 = arith.subf %22, %23 : vector<16x32xf32>
    %cst_10 = arith.constant 1.750000e+00 : f32
    %25 = vector.broadcast %cst_10 : f32 to vector<16x32xf32>
    %26 = arith.mulf %24, %25 : vector<16x32xf32>
    %27 = arith.mulf %26, %26 : vector<16x32xf32>
    %cst_11 = arith.constant 0.000000e+00 : f32
    %28 = vector.broadcast %cst_11 : f32 to vector<16x32xf32>
    %29 = arith.subf %28, %27 : vector<16x32xf32>
    %30 = math.exp %29 : vector<16x32xf32>
    %cst_12 = arith.constant -1.42857146 : f32
    %31 = vector.broadcast %cst_12 : f32 to vector<16x32xf32>
    %32 = arith.subf %22, %31 : vector<16x32xf32>
    %cst_13 = arith.constant 1.750000e+00 : f32
    %33 = vector.broadcast %cst_13 : f32 to vector<16x32xf32>
    %34 = arith.mulf %32, %33 : vector<16x32xf32>
    %35 = arith.mulf %34, %34 : vector<16x32xf32>
    %cst_14 = arith.constant 0.000000e+00 : f32
    %36 = vector.broadcast %cst_14 : f32 to vector<16x32xf32>
    %37 = arith.subf %36, %35 : vector<16x32xf32>
    %38 = math.exp %37 : vector<16x32xf32>
    %cst_15 = arith.constant -0.857142865 : f32
    %39 = vector.broadcast %cst_15 : f32 to vector<16x32xf32>
    %40 = arith.subf %22, %39 : vector<16x32xf32>
    %cst_16 = arith.constant 1.750000e+00 : f32
    %41 = vector.broadcast %cst_16 : f32 to vector<16x32xf32>
    %42 = arith.mulf %40, %41 : vector<16x32xf32>
    %43 = arith.mulf %42, %42 : vector<16x32xf32>
    %cst_17 = arith.constant 0.000000e+00 : f32
    %44 = vector.broadcast %cst_17 : f32 to vector<16x32xf32>
    %45 = arith.subf %44, %43 : vector<16x32xf32>
    %46 = math.exp %45 : vector<16x32xf32>
    %cst_18 = arith.constant -0.285714298 : f32
    %47 = vector.broadcast %cst_18 : f32 to vector<16x32xf32>
    %48 = arith.subf %22, %47 : vector<16x32xf32>
    %cst_19 = arith.constant 1.750000e+00 : f32
    %49 = vector.broadcast %cst_19 : f32 to vector<16x32xf32>
    %50 = arith.mulf %48, %49 : vector<16x32xf32>
    %51 = arith.mulf %50, %50 : vector<16x32xf32>
    %cst_20 = arith.constant 0.000000e+00 : f32
    %52 = vector.broadcast %cst_20 : f32 to vector<16x32xf32>
    %53 = arith.subf %52, %51 : vector<16x32xf32>
    %54 = math.exp %53 : vector<16x32xf32>
    %cst_21 = arith.constant 0.285714298 : f32
    %55 = vector.broadcast %cst_21 : f32 to vector<16x32xf32>
    %56 = arith.subf %22, %55 : vector<16x32xf32>
    %cst_22 = arith.constant 1.750000e+00 : f32
    %57 = vector.broadcast %cst_22 : f32 to vector<16x32xf32>
    %58 = arith.mulf %56, %57 : vector<16x32xf32>
    %59 = arith.mulf %58, %58 : vector<16x32xf32>
    %cst_23 = arith.constant 0.000000e+00 : f32
    %60 = vector.broadcast %cst_23 : f32 to vector<16x32xf32>
    %61 = arith.subf %60, %59 : vector<16x32xf32>
    %62 = math.exp %61 : vector<16x32xf32>
    %cst_24 = arith.constant 0.857142865 : f32
    %63 = vector.broadcast %cst_24 : f32 to vector<16x32xf32>
    %64 = arith.subf %22, %63 : vector<16x32xf32>
    %cst_25 = arith.constant 1.750000e+00 : f32
    %65 = vector.broadcast %cst_25 : f32 to vector<16x32xf32>
    %66 = arith.mulf %64, %65 : vector<16x32xf32>
    %67 = arith.mulf %66, %66 : vector<16x32xf32>
    %cst_26 = arith.constant 0.000000e+00 : f32
    %68 = vector.broadcast %cst_26 : f32 to vector<16x32xf32>
    %69 = arith.subf %68, %67 : vector<16x32xf32>
    %70 = math.exp %69 : vector<16x32xf32>
    %cst_27 = arith.constant 1.42857146 : f32
    %71 = vector.broadcast %cst_27 : f32 to vector<16x32xf32>
    %72 = arith.subf %22, %71 : vector<16x32xf32>
    %cst_28 = arith.constant 1.750000e+00 : f32
    %73 = vector.broadcast %cst_28 : f32 to vector<16x32xf32>
    %74 = arith.mulf %72, %73 : vector<16x32xf32>
    %75 = arith.mulf %74, %74 : vector<16x32xf32>
    %cst_29 = arith.constant 0.000000e+00 : f32
    %76 = vector.broadcast %cst_29 : f32 to vector<16x32xf32>
    %77 = arith.subf %76, %75 : vector<16x32xf32>
    %78 = math.exp %77 : vector<16x32xf32>
    %cst_30 = arith.constant 2.000000e+00 : f32
    %79 = vector.broadcast %cst_30 : f32 to vector<16x32xf32>
    %80 = arith.subf %22, %79 : vector<16x32xf32>
    %cst_31 = arith.constant 1.750000e+00 : f32
    %81 = vector.broadcast %cst_31 : f32 to vector<16x32xf32>
    %82 = arith.mulf %80, %81 : vector<16x32xf32>
    %83 = arith.mulf %82, %82 : vector<16x32xf32>
    %cst_32 = arith.constant 0.000000e+00 : f32
    %84 = vector.broadcast %cst_32 : f32 to vector<16x32xf32>
    %85 = arith.subf %84, %83 : vector<16x32xf32>
    %86 = math.exp %85 : vector<16x32xf32>
    %87 = arith.negf %0 : vector<16x32xf32>
    %88 = math.exp %87 : vector<16x32xf32>
    %cst_33 = arith.constant 1.000000e+00 : f32
    %89 = vector.broadcast %cst_33 : f32 to vector<16x32xf32>
    %90 = arith.addf %89, %88 : vector<16x32xf32>
    %91 = arith.divf %89, %90 : vector<16x32xf32>
    %92 = arith.mulf %0, %91 : vector<16x32xf32>
    %93 = tpu.concatenate %30, %38, %46, %54, %62, %70, %78, %86, %92 in 1 : vector<16x32xf32>, vector<16x32xf32>, vector<16x32xf32>, vector<16x32xf32>, vector<16x32xf32>, vector<16x32xf32>, vector<16x32xf32>, vector<16x32xf32>, vector<16x32xf32> -> vector<16x288xf32>
    %c0_34 = arith.constant 0 : index
    %c0_35 = arith.constant 0 : index
    %94 = vector.load %arg4[%c0_34, %c0_35] : memref<288x64xf32, #tpu.memory_space<vmem>>, vector<288x64xf32>
    %cst_36 = arith.constant dense<0.000000e+00> : vector<16x64xf32>
    %95 = tpu.matmul %93, %94, %cst_36 {dimension_numbers = #tpu.dot_dimension_numbers<[1], [0], [0], [1], [0, 0, 1, 1], [], []>} : vector<16x288xf32>, vector<288x64xf32>, vector<16x64xf32> -> vector<16x64xf32>
    %c0_37 = arith.constant 0 : index
    %c0_38 = arith.constant 0 : index
    %96 = vector.load %arg5[%c0_37, %c0_38] : memref<1x64xf32, #tpu.memory_space<vmem>>, vector<1x64xf32>
    %97 = vector.broadcast %96 : vector<1x64xf32> to vector<16x64xf32>
    %98 = arith.addf %95, %97 : vector<16x64xf32>
    %cst_39 = arith.constant dense<0.000000e+00> : vector<16xf32>
    %99 = vector.multi_reduction <add>, %98, %cst_39 [1] : vector<16x64xf32> to vector<16xf32>
    %100 = vector.shape_cast %99 : vector<16xf32> to vector<16x1xf32>
    %cst_40 = arith.constant 6.400000e+01 : f32
    %101 = vector.broadcast %cst_40 : f32 to vector<16x1xf32>
    %102 = arith.divf %100, %101 : vector<16x1xf32>
    %103 = vector.broadcast %102 : vector<16x1xf32> to vector<16x64xf32>
    %104 = arith.subf %98, %103 : vector<16x64xf32>
    %105 = arith.mulf %104, %104 : vector<16x64xf32>
    %cst_41 = arith.constant dense<0.000000e+00> : vector<16xf32>
    %106 = vector.multi_reduction <add>, %105, %cst_41 [1] : vector<16x64xf32> to vector<16xf32>
    %107 = vector.shape_cast %106 : vector<16xf32> to vector<16x1xf32>
    %cst_42 = arith.constant 6.400000e+01 : f32
    %108 = vector.broadcast %cst_42 : f32 to vector<16x1xf32>
    %109 = arith.divf %107, %108 : vector<16x1xf32>
    %cst_43 = arith.constant 9.99999974E-6 : f32
    %110 = vector.broadcast %cst_43 : f32 to vector<16x1xf32>
    %111 = arith.addf %109, %110 : vector<16x1xf32>
    %112 = math.rsqrt %111 : vector<16x1xf32>
    %113 = vector.broadcast %112 : vector<16x1xf32> to vector<16x64xf32>
    %114 = arith.mulf %104, %113 : vector<16x64xf32>
    %c0_44 = arith.constant 0 : index
    %c0_45 = arith.constant 0 : index
    %115 = vector.load %arg6[%c0_44, %c0_45] : memref<1x64xf32, #tpu.memory_space<vmem>>, vector<1x64xf32>
    %116 = vector.broadcast %115 : vector<1x64xf32> to vector<16x64xf32>
    %117 = arith.mulf %114, %116 : vector<16x64xf32>
    %c0_46 = arith.constant 0 : index
    %c0_47 = arith.constant 0 : index
    %118 = vector.load %arg7[%c0_46, %c0_47] : memref<1x64xf32, #tpu.memory_space<vmem>>, vector<1x64xf32>
    %119 = vector.broadcast %118 : vector<1x64xf32> to vector<16x64xf32>
    %120 = arith.addf %117, %119 : vector<16x64xf32>
    %cst_48 = arith.constant -2.000000e+00 : f32
    %121 = vector.broadcast %cst_48 : f32 to vector<16x64xf32>
    %122 = arith.subf %120, %121 : vector<16x64xf32>
    %cst_49 = arith.constant 1.750000e+00 : f32
    %123 = vector.broadcast %cst_49 : f32 to vector<16x64xf32>
    %124 = arith.mulf %122, %123 : vector<16x64xf32>
    %125 = arith.mulf %124, %124 : vector<16x64xf32>
    %cst_50 = arith.constant 0.000000e+00 : f32
    %126 = vector.broadcast %cst_50 : f32 to vector<16x64xf32>
    %127 = arith.subf %126, %125 : vector<16x64xf32>
    %128 = math.exp %127 : vector<16x64xf32>
    %cst_51 = arith.constant -1.42857146 : f32
    %129 = vector.broadcast %cst_51 : f32 to vector<16x64xf32>
    %130 = arith.subf %120, %129 : vector<16x64xf32>
    %cst_52 = arith.constant 1.750000e+00 : f32
    %131 = vector.broadcast %cst_52 : f32 to vector<16x64xf32>
    %132 = arith.mulf %130, %131 : vector<16x64xf32>
    %133 = arith.mulf %132, %132 : vector<16x64xf32>
    %cst_53 = arith.constant 0.000000e+00 : f32
    %134 = vector.broadcast %cst_53 : f32 to vector<16x64xf32>
    %135 = arith.subf %134, %133 : vector<16x64xf32>
    %136 = math.exp %135 : vector<16x64xf32>
    %cst_54 = arith.constant -0.857142865 : f32
    %137 = vector.broadcast %cst_54 : f32 to vector<16x64xf32>
    %138 = arith.subf %120, %137 : vector<16x64xf32>
    %cst_55 = arith.constant 1.750000e+00 : f32
    %139 = vector.broadcast %cst_55 : f32 to vector<16x64xf32>
    %140 = arith.mulf %138, %139 : vector<16x64xf32>
    %141 = arith.mulf %140, %140 : vector<16x64xf32>
    %cst_56 = arith.constant 0.000000e+00 : f32
    %142 = vector.broadcast %cst_56 : f32 to vector<16x64xf32>
    %143 = arith.subf %142, %141 : vector<16x64xf32>
    %144 = math.exp %143 : vector<16x64xf32>
    %cst_57 = arith.constant -0.285714298 : f32
    %145 = vector.broadcast %cst_57 : f32 to vector<16x64xf32>
    %146 = arith.subf %120, %145 : vector<16x64xf32>
    %cst_58 = arith.constant 1.750000e+00 : f32
    %147 = vector.broadcast %cst_58 : f32 to vector<16x64xf32>
    %148 = arith.mulf %146, %147 : vector<16x64xf32>
    %149 = arith.mulf %148, %148 : vector<16x64xf32>
    %cst_59 = arith.constant 0.000000e+00 : f32
    %150 = vector.broadcast %cst_59 : f32 to vector<16x64xf32>
    %151 = arith.subf %150, %149 : vector<16x64xf32>
    %152 = math.exp %151 : vector<16x64xf32>
    %cst_60 = arith.constant 0.285714298 : f32
    %153 = vector.broadcast %cst_60 : f32 to vector<16x64xf32>
    %154 = arith.subf %120, %153 : vector<16x64xf32>
    %cst_61 = arith.constant 1.750000e+00 : f32
    %155 = vector.broadcast %cst_61 : f32 to vector<16x64xf32>
    %156 = arith.mulf %154, %155 : vector<16x64xf32>
    %157 = arith.mulf %156, %156 : vector<16x64xf32>
    %cst_62 = arith.constant 0.000000e+00 : f32
    %158 = vector.broadcast %cst_62 : f32 to vector<16x64xf32>
    %159 = arith.subf %158, %157 : vector<16x64xf32>
    %160 = math.exp %159 : vector<16x64xf32>
    %cst_63 = arith.constant 0.857142865 : f32
    %161 = vector.broadcast %cst_63 : f32 to vector<16x64xf32>
    %162 = arith.subf %120, %161 : vector<16x64xf32>
    %cst_64 = arith.constant 1.750000e+00 : f32
    %163 = vector.broadcast %cst_64 : f32 to vector<16x64xf32>
    %164 = arith.mulf %162, %163 : vector<16x64xf32>
    %165 = arith.mulf %164, %164 : vector<16x64xf32>
    %cst_65 = arith.constant 0.000000e+00 : f32
    %166 = vector.broadcast %cst_65 : f32 to vector<16x64xf32>
    %167 = arith.subf %166, %165 : vector<16x64xf32>
    %168 = math.exp %167 : vector<16x64xf32>
    %cst_66 = arith.constant 1.42857146 : f32
    %169 = vector.broadcast %cst_66 : f32 to vector<16x64xf32>
    %170 = arith.subf %120, %169 : vector<16x64xf32>
    %cst_67 = arith.constant 1.750000e+00 : f32
    %171 = vector.broadcast %cst_67 : f32 to vector<16x64xf32>
    %172 = arith.mulf %170, %171 : vector<16x64xf32>
    %173 = arith.mulf %172, %172 : vector<16x64xf32>
    %cst_68 = arith.constant 0.000000e+00 : f32
    %174 = vector.broadcast %cst_68 : f32 to vector<16x64xf32>
    %175 = arith.subf %174, %173 : vector<16x64xf32>
    %176 = math.exp %175 : vector<16x64xf32>
    %cst_69 = arith.constant 2.000000e+00 : f32
    %177 = vector.broadcast %cst_69 : f32 to vector<16x64xf32>
    %178 = arith.subf %120, %177 : vector<16x64xf32>
    %cst_70 = arith.constant 1.750000e+00 : f32
    %179 = vector.broadcast %cst_70 : f32 to vector<16x64xf32>
    %180 = arith.mulf %178, %179 : vector<16x64xf32>
    %181 = arith.mulf %180, %180 : vector<16x64xf32>
    %cst_71 = arith.constant 0.000000e+00 : f32
    %182 = vector.broadcast %cst_71 : f32 to vector<16x64xf32>
    %183 = arith.subf %182, %181 : vector<16x64xf32>
    %184 = math.exp %183 : vector<16x64xf32>
    %185 = arith.negf %98 : vector<16x64xf32>
    %186 = math.exp %185 : vector<16x64xf32>
    %cst_72 = arith.constant 1.000000e+00 : f32
    %187 = vector.broadcast %cst_72 : f32 to vector<16x64xf32>
    %188 = arith.addf %187, %186 : vector<16x64xf32>
    %189 = arith.divf %187, %188 : vector<16x64xf32>
    %190 = arith.mulf %98, %189 : vector<16x64xf32>
    %191 = tpu.concatenate %128, %136, %144, %152, %160, %168, %176, %184, %190 in 1 : vector<16x64xf32>, vector<16x64xf32>, vector<16x64xf32>, vector<16x64xf32>, vector<16x64xf32>, vector<16x64xf32>, vector<16x64xf32>, vector<16x64xf32>, vector<16x64xf32> -> vector<16x576xf32>
    %c0_73 = arith.constant 0 : index
    %c0_74 = arith.constant 0 : index
    %192 = vector.load %arg8[%c0_73, %c0_74] : memref<576x16xf32, #tpu.memory_space<vmem>>, vector<576x16xf32>
    %cst_75 = arith.constant dense<0.000000e+00> : vector<16x16xf32>
    %193 = tpu.matmul %191, %192, %cst_75 {dimension_numbers = #tpu.dot_dimension_numbers<[1], [0], [0], [1], [0, 0, 1, 1], [], []>} : vector<16x576xf32>, vector<576x16xf32>, vector<16x16xf32> -> vector<16x16xf32>
    %c0_76 = arith.constant 0 : index
    %c0_77 = arith.constant 0 : index
    %194 = vector.load %arg9[%c0_76, %c0_77] : memref<1x16xf32, #tpu.memory_space<vmem>>, vector<1x16xf32>
    %195 = vector.broadcast %194 : vector<1x16xf32> to vector<16x16xf32>
    %196 = arith.addf %193, %195 : vector<16x16xf32>
    %c0_78 = arith.constant 0 : index
    %c0_79 = arith.constant 0 : index
    %197 = vector.load %arg10[%c0_78, %c0_79] : memref<16x16xf32, #tpu.memory_space<vmem>>, vector<16x16xf32>
    tpu.vector_store %arg10[%c0_78, %c0_79], %196 {strides = array<i32>} : memref<16x16xf32, #tpu.memory_space<vmem>>, vector<16x16xf32>,
    return
  }
  func.func @transform_0(%arg0: i32) -> (i32, i32) {
    %c0_i32 = arith.constant 0 : i32
    %c0_i32_0 = arith.constant 0 : i32
    return %arg0, %c0_i32 : i32, i32
  }
  func.func @transform_1(%arg0: i32) -> (i32, i32) {
    %c0_i32 = arith.constant 0 : i32
    %c0_i32_0 = arith.constant 0 : i32
    %c0_i32_1 = arith.constant 0 : i32
    return %c0_i32, %c0_i32_0 : i32, i32
  }
  func.func @transform_2(%arg0: i32) -> (i32, i32) {
    %c0_i32 = arith.constant 0 : i32
    %c0_i32_0 = arith.constant 0 : i32
    %c0_i32_1 = arith.constant 0 : i32
    return %c0_i32, %c0_i32_0 : i32, i32
  }
  func.func @transform_3(%arg0: i32) -> (i32, i32) {
    %c0_i32 = arith.constant 0 : i32
    %c0_i32_0 = arith.constant 0 : i32
    %c0_i32_1 = arith.constant 0 : i32
    return %c0_i32, %c0_i32_0 : i32, i32
  }
  func.func @transform_4(%arg0: i32) -> (i32, i32) {
    %c0_i32 = arith.constant 0 : i32
    %c0_i32_0 = arith.constant 0 : i32
    %c0_i32_1 = arith.constant 0 : i32
    return %c0_i32, %c0_i32_0 : i32, i32
  }
  func.func @transform_5(%arg0: i32) -> (i32, i32) {
    %c0_i32 = arith.constant 0 : i32
    %c0_i32_0 = arith.constant 0 : i32
    %c0_i32_1 = arith.constant 0 : i32
    return %c0_i32, %c0_i32_0 : i32, i32
  }
  func.func @transform_6(%arg0: i32) -> (i32, i32) {
    %c0_i32 = arith.constant 0 : i32
    %c0_i32_0 = arith.constant 0 : i32
    %c0_i32_1 = arith.constant 0 : i32
    return %c0_i32, %c0_i32_0 : i32, i32
  }
  func.func @transform_7(%arg0: i32) -> (i32, i32) {
    %c0_i32 = arith.constant 0 : i32
    %c0_i32_0 = arith.constant 0 : i32
    %c0_i32_1 = arith.constant 0 : i32
    return %c0_i32, %c0_i32_0 : i32, i32
  }
  func.func @transform_8(%arg0: i32) -> (i32, i32) {
    %c0_i32 = arith.constant 0 : i32
    %c0_i32_0 = arith.constant 0 : i32
    %c0_i32_1 = arith.constant 0 : i32
    return %c0_i32, %c0_i32_0 : i32, i32
  }
  func.func @transform_9(%arg0: i32) -> (i32, i32) {
    %c0_i32 = arith.constant 0 : i32
    %c0_i32_0 = arith.constant 0 : i32
    return %arg0, %c0_i32 : i32, i32
  }
}

</mosaic_0001>

<llo_original>
// kernel: tpu_custom_call.1
$region0: #{tpu_custom_call.1}
  #allocation0 [shape = 'u32[]', space=smem, size = 0x4, offset = 0x4, fixed_abs, tag = 'smem constant byte address 0x4 - core index']
  #allocation1 [shape = 'u32[144,128]{1,0:T(1,128)}', space=vmem, size = 0x12000, scoped, tag = 'internal scratch']
  %s0 = inlined_call_operand.vmem [shape: f32[16,32], index: 0, kind: input, shape index: {}]
  %s1 = inlined_call_operand.vmem [shape: f32[1,32], index: 1, kind: input, shape index: {}]
  %s2 = inlined_call_operand.vmem [shape: f32[1,32], index: 2, kind: input, shape index: {}]
  %s3 = inlined_call_operand.vmem [shape: f32[288,64], index: 3, kind: input, shape index: {}]
  %s4 = inlined_call_operand.vmem [shape: f32[1,64], index: 4, kind: input, shape index: {}]
  %s5 = inlined_call_operand.vmem [shape: f32[1,64], index: 5, kind: input, shape index: {}]
  %s6 = inlined_call_operand.vmem [shape: f32[1,64], index: 6, kind: input, shape index: {}]
  %s7 = inlined_call_operand.vmem [shape: f32[576,16], index: 7, kind: input, shape index: {}]
  %s8 = inlined_call_operand.vmem [shape: f32[1,16], index: 8, kind: input, shape index: {}]
  %s9 = inlined_call_operand.hbm [shape: f32[16,16], index: 9, kind: output, shape index: {}]
  %s10 = sld [smem:[#allocation0]]
  $region46: #{tpu_custom_call.1} parent=0
    _
  %s12 = ssub.s32 1, %s10
  %s13 = scalar_select 0, %s12, %s10
  $region1: #{tpu_custom_call.1} parent=0
    #allocation2 [shape = 'u8[8192]{0}', space=vmem, size = 0x2000, scoped, tag = 'output window, operand 0, single buffered']
    #allocation3 [shape = 's32[1]{0}', space=sflag, size = 0x4, scoped, tag = 'scoped memory for tpu_custom_call.1']
    %14 = vsyncpa [#allocation3], 0
    // Predicated region
    $region2: #{tpu_custom_call.1} parent=1 // pred_check
      _
    $region3: #{tpu_custom_call.1} parent=1 // pred_check_branch
      %16 = sbr.rel (0) target = $region5
    $region4: #{tpu_custom_call.1} parent=1 // pred_region
      _
    $region5: #{tpu_custom_call.1} parent=1 // pred_fallthru
      _
    // Predicated region
    $region6: #{tpu_custom_call.1} parent=1 // pred_check
      _
    $region7: #{tpu_custom_call.1} parent=1 // pred_check_branch
      %18 = sbr.rel (0) target = $region9
    $region8: #{tpu_custom_call.1} parent=1 // pred_region
      _
    $region9: #{tpu_custom_call.1} parent=1 // pred_fallthru
      _
    // Predicated region
    $region10: #{tpu_custom_call.1} parent=1 // pred_check
      _
    $region11: #{tpu_custom_call.1} parent=1 // pred_check_branch
      %20 = sbr.rel (0) target = $region13
    $region12: #{tpu_custom_call.1} parent=1 // pred_region
      _
    $region13: #{tpu_custom_call.1} parent=1 // pred_fallthru
      _
    // Predicated region
    $region14: #{tpu_custom_call.1} parent=1 // pred_check
      _
    $region15: #{tpu_custom_call.1} parent=1 // pred_check_branch
      %22 = sbr.rel (0) target = $region17
    $region16: #{tpu_custom_call.1} parent=1 // pred_region
      _
    $region17: #{tpu_custom_call.1} parent=1 // pred_fallthru
      _
    // Predicated region
    $region18: #{tpu_custom_call.1} parent=1 // pred_check
      _
    $region19: #{tpu_custom_call.1} parent=1 // pred_check_branch
      %24 = sbr.rel (0) target = $region21
    $region20: #{tpu_custom_call.1} parent=1 // pred_region
      _
    $region21: #{tpu_custom_call.1} parent=1 // pred_fallthru
      _
    // Predicated region
    $region22: #{tpu_custom_call.1} parent=1 // pred_check
      _
    $region23: #{tpu_custom_call.1} parent=1 // pred_check_branch
      %26 = sbr.rel (0) target = $region25
    $region24: #{tpu_custom_call.1} parent=1 // pred_region
      _
    $region25: #{tpu_custom_call.1} parent=1 // pred_fallthru
      _
    // Predicated region
    $region26: #{tpu_custom_call.1} parent=1 // pred_check
      _
    $region27: #{tpu_custom_call.1} parent=1 // pred_check_branch
      %28 = sbr.rel (0) target = $region29
    $region28: #{tpu_custom_call.1} parent=1 // pred_region
      _
    $region29: #{tpu_custom_call.1} parent=1 // pred_fallthru
      _
    // Predicated region
    $region30: #{tpu_custom_call.1} parent=1 // pred_check
      _
    $region31: #{tpu_custom_call.1} parent=1 // pred_check_branch
      %30 = sbr.rel (0) target = $region33
    $region32: #{tpu_custom_call.1} parent=1 // pred_region
      _
    $region33: #{tpu_custom_call.1} parent=1 // pred_fallthru
      _
    // Predicated region
    $region34: #{tpu_custom_call.1} parent=1 // pred_check
      _
    $region35: #{tpu_custom_call.1} parent=1 // pred_check_branch
      %32 = sbr.rel (0) target = $region37
    $region36: #{tpu_custom_call.1} parent=1 // pred_region
      _
    $region37: #{tpu_custom_call.1} parent=1 // pred_fallthru
      _
    %v33 = vld [vmem:[%s0] sm:$0xff]
    %v34 = vld [vmem:[%s0 + $0x8] sm:$0xff]
    %vm35 = vcmask 261120
    %v36 = vsel %vm35, %v33, 0.0
    %37 = vadd.xlane.f32.xlu0 %v36
    %v38 = vpop.xlane.xlu0 %37
    %v39 = vsel %vm35, %v34, 0.0
    %40 = vadd.xlane.f32.xlu0 %v39
    %v41 = vpop.xlane.xlu0 %40
    %v42 = vrcp.pop 32.0
    %v43 = vmul.f32 %v38, %v42
    %v44 = vmul.f32 %v41, %v42
    %v45 = vsub.f32 %v33, %v43
    %v46 = vsub.f32 %v34, %v44
    %v47 = vmul.f32 %v45, %v45
    %v48 = vmul.f32 %v46, %v46
    %v49 = vsel %vm35, %v47, 0.0
    %50 = vadd.xlane.f32.xlu0 %v49
    %v51 = vpop.xlane.xlu0 %50
    %v52 = vsel %vm35, %v48, 0.0
    %53 = vadd.xlane.f32.xlu0 %v52
    %v54 = vpop.xlane.xlu0 %53
    %v55 = vmul.f32 %v51, %v42
    %v56 = vmul.f32 %v54, %v42
    %v57 = vadd.f32 %v55, 1e-05
    %v58 = vadd.f32 %v56, 1e-05
    %v59 = vrsqrt.pop %v57
    %v60 = vrsqrt.pop %v58
    %v61 = vmul.f32 %v45, %v59
    %v62 = vmul.f32 %v46, %v60
    %v63 = vld [vmem:[%s1] sm:$0x1]
    %v65 = vlaneseq
    %v66 = vshrl.u32 %v65, 7
    %v67 = vsub.s32 0, %v66
    %v68 = vrot.slane %v63, %v67
    %v70 = vmul.f32 %v61, %v68
    %v71 = vmul.f32 %v62, %v68
    %v72 = vld [vmem:[%s2] sm:$0x1]
    %v74 = vlaneseq
    %v75 = vshrl.u32 %v74, 7
    %v76 = vsub.s32 0, %v75
    %v77 = vrot.slane %v72, %v76
    %v79 = vadd.f32 %v70, %v77
    %v80 = vadd.f32 %v71, %v77
    %v81 = vsub.f32 %v79, -2.0
    %v82 = vsub.f32 %v80, -2.0
    %v83 = vmul.f32 %v81, 1.75
    %v84 = vmul.f32 %v82, 1.75
    %v85 = vmul.f32 %v83, %v83
    %v86 = vmul.f32 %v84, %v84
    %v87 = vsub.f32 0.0, %v85
    %v88 = vsub.f32 0.0, %v86
    %v89 = vmul.f32 %v87, 1.442695
    %v90 = vpow.pop %v89
    %v91 = vmul.f32 %v88, 1.442695
    %v92 = vpow.pop %v91
    %v93 = vsub.f32 %v79, -1.4285715
    %v94 = vsub.f32 %v80, -1.4285715
    %v95 = vmul.f32 %v93, 1.75
    %v96 = vmul.f32 %v94, 1.75
    %v97 = vmul.f32 %v95, %v95
    %v98 = vmul.f32 %v96, %v96
    %v99 = vsub.f32 0.0, %v97
    %v100 = vsub.f32 0.0, %v98
    %v101 = vmul.f32 %v99, 1.442695
    %v102 = vpow.pop %v101
    %v103 = vmul.f32 %v100, 1.442695
    %v104 = vpow.pop %v103
    %v105 = vsub.f32 %v79, -0.85714287
    %v106 = vsub.f32 %v80, -0.85714287
    %v107 = vmul.f32 %v105, 1.75
    %v108 = vmul.f32 %v106, 1.75
    %v109 = vmul.f32 %v107, %v107
    %v110 = vmul.f32 %v108, %v108
    %v111 = vsub.f32 0.0, %v109
    %v112 = vsub.f32 0.0, %v110
    %v113 = vmul.f32 %v111, 1.442695
    %v114 = vpow.pop %v113
    %v115 = vmul.f32 %v112, 1.442695
    %v116 = vpow.pop %v115
    %v117 = vsub.f32 %v79, -0.2857143
    %v118 = vsub.f32 %v80, -0.2857143
    %v119 = vmul.f32 %v117, 1.75
    %v120 = vmul.f32 %v118, 1.75
    %v121 = vmul.f32 %v119, %v119
    %v122 = vmul.f32 %v120, %v120
    %v123 = vsub.f32 0.0, %v121
    %v124 = vsub.f32 0.0, %v122
    %v125 = vmul.f32 %v123, 1.442695
    %v126 = vpow.pop %v125
    %v127 = vmul.f32 %v124, 1.442695
    %v128 = vpow.pop %v127
    %v129 = vsub.f32 %v79, 0.2857143
    %v130 = vsub.f32 %v80, 0.2857143
    %v131 = vmul.f32 %v129, 1.75
    %v132 = vmul.f32 %v130, 1.75
    %v133 = vmul.f32 %v131, %v131
    %v134 = vmul.f32 %v132, %v132
    %v135 = vsub.f32 0.0, %v133
    %v136 = vsub.f32 0.0, %v134
    %v137 = vmul.f32 %v135, 1.442695
    %v138 = vpow.pop %v137
    %v139 = vmul.f32 %v136, 1.442695
    %v140 = vpow.pop %v139
    %v141 = vsub.f32 %v79, 0.85714287
    %v142 = vsub.f32 %v80, 0.85714287
    %v143 = vmul.f32 %v141, 1.75
    %v144 = vmul.f32 %v142, 1.75
    %v145 = vmul.f32 %v143, %v143
    %v146 = vmul.f32 %v144, %v144
    %v147 = vsub.f32 0.0, %v145
    %v148 = vsub.f32 0.0, %v146
    %v149 = vmul.f32 %v147, 1.442695
    %v150 = vpow.pop %v149
    %v151 = vmul.f32 %v148, 1.442695
    %v152 = vpow.pop %v151
    %v153 = vsub.f32 %v79, 1.4285715
    %v154 = vsub.f32 %v80, 1.4285715
    %v155 = vmul.f32 %v153, 1.75
    %v156 = vmul.f32 %v154, 1.75
    %v157 = vmul.f32 %v155, %v155
    %v158 = vmul.f32 %v156, %v156
    %v159 = vsub.f32 0.0, %v157
    %v160 = vsub.f32 0.0, %v158
    %v161 = vmul.f32 %v159, 1.442695
    %v162 = vpow.pop %v161
    %v163 = vmul.f32 %v160, 1.442695
    %v164 = vpow.pop %v163
    %v165 = vsub.f32 %v79, 2.0
    %v166 = vsub.f32 %v80, 2.0
    %v167 = vmul.f32 %v165, 1.75
    %v168 = vmul.f32 %v166, 1.75
    %v169 = vmul.f32 %v167, %v167
    %v170 = vmul.f32 %v168, %v168
    %v171 = vsub.f32 0.0, %v169
    %v172 = vsub.f32 0.0, %v170
    %v173 = vmul.f32 %v171, 1.442695
    %v174 = vpow.pop %v173
    %v175 = vmul.f32 %v172, 1.442695
    %v176 = vpow.pop %v175
    %v177 = vxor.u32 %v33, 2147483648
    %v178 = vxor.u32 %v34, 2147483648
    %v179 = vmul.f32 %v177, 1.442695
    %v180 = vpow.pop %v179
    %v181 = vmul.f32 %v178, 1.442695
    %v182 = vpow.pop %v181
    %v183 = vadd.f32 %v180, 1.0
    %v184 = vadd.f32 %v182, 1.0
    %v185 = vrcp.pop %v183
    %v186 = vmul.f32 1.0, %v185
    %v187 = vrcp.pop %v184
    %v188 = vmul.f32 1.0, %v187
    %v189 = vmul.f32 %v33, %v186
    %v190 = vmul.f32 %v34, %v188
    %193 = vrot.lane.b32.xlu0 %v102, 32
    %v194 = vpop.permute.xlu0 %193
    %195 = vrot.lane.b32.xlu0 %v104, 32
    %v196 = vpop.permute.xlu0 %195
    %201 = vrot.lane.b32.xlu0 %v114, 64
    %v202 = vpop.permute.xlu0 %201
    %203 = vrot.lane.b32.xlu0 %v116, 64
    %v204 = vpop.permute.xlu0 %203
    %209 = vrot.lane.b32.xlu0 %v126, 96
    %v210 = vpop.permute.xlu0 %209
    %211 = vrot.lane.b32.xlu0 %v128, 96
    %v212 = vpop.permute.xlu0 %211
    %217 = vrot.lane.b32.xlu0 %v150, 32
    %v218 = vpop.permute.xlu0 %217
    %219 = vrot.lane.b32.xlu0 %v152, 32
    %v220 = vpop.permute.xlu0 %219
    %225 = vrot.lane.b32.xlu0 %v162, 64
    %v226 = vpop.permute.xlu0 %225
    %227 = vrot.lane.b32.xlu0 %v164, 64
    %v228 = vpop.permute.xlu0 %227
    %233 = vrot.lane.b32.xlu0 %v174, 96
    %v234 = vpop.permute.xlu0 %233
    %235 = vrot.lane.b32.xlu0 %v176, 96
    %v236 = vpop.permute.xlu0 %235
    %v239 = vsel %vm35, %v90, %v194
    %v240 = vsel %vm35, %v92, %v196
    %vm241 = vcmask 523264
    %v242 = vsel %vm241, %v239, %v202
    %v243 = vsel %vm241, %v240, %v204
    %vm244 = vcmask 785408
    %v245 = vsel %vm244, %v242, %v210
    %v246 = vsel %vm244, %v243, %v212
    %v247 = vsel %vm35, %v138, %v218
    %v248 = vsel %vm35, %v140, %v220
    %v249 = vsel %vm241, %v247, %v226
    %v250 = vsel %vm241, %v248, %v228
    %v251 = vsel %vm244, %v249, %v234
    %v252 = vsel %vm244, %v250, %v236
    %v253 = vld [vmem:[%s3] sm:$0xff]
    %v254 = vld [vmem:[%s3 + $0x8] sm:$0xff]
    %v255 = vld [vmem:[%s3 + $0x10] sm:$0xff]
    %v256 = vld [vmem:[%s3 + $0x18] sm:$0xff]
    %v257 = vld [vmem:[%s3 + $0x20] sm:$0xff]
    %v258 = vld [vmem:[%s3 + $0x28] sm:$0xff]
    %v259 = vld [vmem:[%s3 + $0x30] sm:$0xff]
    %v260 = vld [vmem:[%s3 + $0x38] sm:$0xff]
    %v261 = vld [vmem:[%s3 + $0x40] sm:$0xff]
    %v262 = vld [vmem:[%s3 + $0x48] sm:$0xff]
    %v263 = vld [vmem:[%s3 + $0x50] sm:$0xff]
    %v264 = vld [vmem:[%s3 + $0x58] sm:$0xff]
    %v265 = vld [vmem:[%s3 + $0x60] sm:$0xff]
    %v266 = vld [vmem:[%s3 + $0x68] sm:$0xff]
    %v267 = vld [vmem:[%s3 + $0x70] sm:$0xff]
    %v268 = vld [vmem:[%s3 + $0x78] sm:$0xff]
    %v269 = vld [vmem:[%s3 + $0x80] sm:$0xff]
    %v270 = vld [vmem:[%s3 + $0x88] sm:$0xff]
    %v271 = vld [vmem:[%s3 + $0x90] sm:$0xff]
    %v272 = vld [vmem:[%s3 + $0x98] sm:$0xff]
    %v273 = vld [vmem:[%s3 + $0xa0] sm:$0xff]
    %v274 = vld [vmem:[%s3 + $0xa8] sm:$0xff]
    %v275 = vld [vmem:[%s3 + $0xb0] sm:$0xff]
    %v276 = vld [vmem:[%s3 + $0xb8] sm:$0xff]
    %v277 = vld [vmem:[%s3 + $0xc0] sm:$0xff]
    %v278 = vld [vmem:[%s3 + $0xc8] sm:$0xff]
    %v279 = vld [vmem:[%s3 + $0xd0] sm:$0xff]
    %v280 = vld [vmem:[%s3 + $0xd8] sm:$0xff]
    %v281 = vld [vmem:[%s3 + $0xe0] sm:$0xff]
    %v282 = vld [vmem:[%s3 + $0xe8] sm:$0xff]
    %v283 = vld [vmem:[%s3 + $0xf0] sm:$0xff]
    %v284 = vld [vmem:[%s3 + $0xf8] sm:$0xff]
    %v285 = vld [vmem:[%s3 + $0x100] sm:$0xff]
    %v286 = vld [vmem:[%s3 + $0x108] sm:$0xff]
    %v287 = vld [vmem:[%s3 + $0x110] sm:$0xff]
    %v288 = vld [vmem:[%s3 + $0x118] sm:$0xff]
    %v289 = vld [vmem:[%s4] sm:$0x1]
    %v291 = vlaneseq
    %v292 = vshrl.u32 %v291, 7
    %v293 = vsub.s32 0, %v292
    %v294 = vrot.slane %v289, %v293
    %v297 = vsel %vm35, %v189, 0
    %v300 = vsel %vm35, %v190, 0
    %302 = vmatprep.subr.mxu0 0.0
    %303 = vmatpush1.msra.mxu0 %v253
    %304 = vmatprep.subr.mxu0 0.0
    %305 = vmatpush1.msra.mxu0 %v254
    %306 = vmatprep.subr.mxu0 0.0
    %307 = vmatpush1.msra.mxu0 %v255
    %308 = vmatprep.subr.mxu0 0.0
    %309 = vmatpush1.msra.mxu0 %v256
    %310 = vmatprep.subr.mxu0 0.0
    %311 = vmatpush1.msra.mxu0 %v257
    %312 = vmatprep.subr.mxu0 0.0
    %313 = vmatpush1.msra.mxu0 %v258
    %314 = vmatprep.subr.mxu0 0.0
    %315 = vmatpush1.msra.mxu0 %v259
    %316 = vmatprep.subr.mxu0 0.0
    %317 = vmatpush1.msra.mxu0 %v260
    %318 = vmatprep.subr.mxu0 0.0
    %319 = vmatpush1.msra.mxu0 %v261
    %320 = vmatprep.subr.mxu0 0.0
    %321 = vmatpush1.msra.mxu0 %v262
    %322 = vmatprep.subr.mxu0 0.0
    %323 = vmatpush1.msra.mxu0 %v263
    %324 = vmatprep.subr.mxu0 0.0
    %325 = vmatpush1.msra.mxu0 %v264
    %326 = vmatprep.subr.mxu0 0.0
    %327 = vmatpush1.msra.mxu0 %v265
    %328 = vmatprep.subr.mxu0 0.0
    %329 = vmatpush1.msra.mxu0 %v266
    %330 = vmatprep.subr.mxu0 0.0
    %331 = vmatpush1.msra.mxu0 %v267
    %332 = vmatprep.subr.mxu0 0.0
    %333 = vmatpush1.msra.mxu0 %v268
    %334 = vmatprep.subr.mxu0 0.0
    %335 = vmatpush1.msra.mxu0 %v269
    %336 = vmatprep.subr.mxu0 0.0
    %337 = vmatpush1.msra.mxu0 %v270
    %338 = vmatprep.subr.mxu0 0.0
    %339 = vmatpush1.msra.mxu0 %v271
    %340 = vmatprep.subr.mxu0 0.0
    %341 = vmatpush1.msra.mxu0 %v272
    %342 = vmatprep.subr.mxu0 0.0
    %343 = vmatpush1.msra.mxu0 %v273
    %344 = vmatprep.subr.mxu0 0.0
    %345 = vmatpush1.msra.mxu0 %v274
    %346 = vmatprep.subr.mxu0 0.0
    %347 = vmatpush1.msra.mxu0 %v275
    %348 = vmatprep.subr.mxu0 0.0
    %349 = vmatpush1.msra.mxu0 %v276
    %350 = vmatprep.subr.mxu0 0.0
    %351 = vmatpush1.msra.mxu0 %v277
    %352 = vmatprep.subr.mxu0 0.0
    %353 = vmatpush1.msra.mxu0 %v278
    %354 = vmatprep.subr.mxu0 0.0
    %355 = vmatpush1.msra.mxu0 %v279
    %356 = vmatprep.subr.mxu0 0.0
    %357 = vmatpush1.msra.mxu0 %v280
    %358 = vmatprep.subr.mxu0 0.0
    %359 = vmatpush1.msra.mxu0 %v281
    %360 = vmatprep.subr.mxu0 0.0
    %361 = vmatpush1.msra.mxu0 %v282
    %362 = vmatprep.subr.mxu0 0.0
    %363 = vmatpush1.msra.mxu0 %v283
    %364 = vmatprep.subr.mxu0 0.0
    %365 = vmatpush1.msra.mxu0 %v284
    %366 = vmatprep.mubr.f32.mxu0 %v251
    %367 = vmatmul.mubr.f32.gmra.mrb[0].mxu0 %v245
    %v368 = vpop.f32.mrb[0].mxu0
    %v369 = vadd.f32 %v294, %v368
    %v370 = vpop.f32.mrb[0].mxu0
    %371 = vmatprep.mubr.f32.mxu0 %v252
    %372 = vmatmul.mubr.f32.gmra.mrb[0].mxu0 %v246
    %v373 = vpop.f32.mrb[0].mxu0
    %v374 = vadd.f32 %v294, %v373
    %v375 = vpop.f32.mrb[0].mxu0
    %376 = vdwg.mxu0
    %377 = vmatprep.subr.mxu0 0.0
    %378 = vmatpush1.msra.mxu0 %v285
    %379 = vmatprep.subr.mxu0 0.0
    %380 = vmatpush1.msra.mxu0 %v286
    %381 = vmatprep.subr.mxu0 0.0
    %382 = vmatpush1.msra.mxu0 %v287
    %383 = vmatprep.subr.mxu0 0.0
    %384 = vmatpush1.msra.mxu0 %v288
    %385 = vmatprep.subr.mxu0 0.0
    %386 = vmatpush1.msra.mxu0 0.0
    %387 = vmatprep.subr.mxu0 0.0
    %388 = vmatpush1.msra.mxu0 0.0
    %389 = vmatprep.subr.mxu0 0.0
    %390 = vmatpush1.msra.mxu0 0.0
    %391 = vmatprep.subr.mxu0 0.0
    %392 = vmatpush1.msra.mxu0 0.0
    %393 = vmatprep.subr.mxu0 0.0
    %394 = vmatpush1.msra.mxu0 0.0
    %395 = vmatprep.subr.mxu0 0.0
    %396 = vmatpush1.msra.mxu0 0.0
    %397 = vmatprep.subr.mxu0 0.0
    %398 = vmatpush1.msra.mxu0 0.0
    %399 = vmatprep.subr.mxu0 0.0
    %400 = vmatpush1.msra.mxu0 0.0
    %401 = vmatprep.subr.mxu0 0.0
    %402 = vmatpush1.msra.mxu0 0.0
    %403 = vmatprep.subr.mxu0 0.0
    %404 = vmatpush1.msra.mxu0 0.0
    %405 = vmatprep.subr.mxu0 0.0
    %406 = vmatpush1.msra.mxu0 0.0
    %407 = vmatprep.subr.mxu0 0.0
    %408 = vmatpush1.msra.mxu0 0.0
    %409 = vmatprep.subr.mxu0 0.0
    %410 = vmatpush1.msra.mxu0 0.0
    %411 = vmatprep.subr.mxu0 0.0
    %412 = vmatpush1.msra.mxu0 0.0
    %413 = vmatprep.subr.mxu0 0.0
    %414 = vmatpush1.msra.mxu0 0.0
    %415 = vmatprep.subr.mxu0 0.0
    %416 = vmatpush1.msra.mxu0 0.0
    %417 = vmatprep.subr.mxu0 0.0
    %418 = vmatpush1.msra.mxu0 0.0
    %419 = vmatprep.subr.mxu0 0.0
    %420 = vmatpush1.msra.mxu0 0.0
    %421 = vmatprep.subr.mxu0 0.0
    %422 = vmatpush1.msra.mxu0 0.0
    %423 = vmatprep.subr.mxu0 0.0
    %424 = vmatpush1.msra.mxu0 0.0
    %425 = vmatprep.subr.mxu0 0.0
    %426 = vmatpush1.msra.mxu0 0.0
    %427 = vmatprep.subr.mxu0 0.0
    %428 = vmatpush1.msra.mxu0 0.0
    %429 = vmatprep.subr.mxu0 0.0
    %430 = vmatpush1.msra.mxu0 0.0
    %431 = vmatprep.subr.mxu0 0.0
    %432 = vmatpush1.msra.mxu0 0.0
    %433 = vmatprep.subr.mxu0 0.0
    %434 = vmatpush1.msra.mxu0 0.0
    %435 = vmatprep.subr.mxu0 0.0
    %436 = vmatpush1.msra.mxu0 0.0
    %437 = vmatprep.subr.mxu0 0.0
    %438 = vmatpush1.msra.mxu0 0.0
    %439 = vmatprep.subr.mxu0 0.0
    %440 = vmatpush1.msra.mxu0 0.0
    %441 = vmatprep.mubr.f32.mxu0 0.0
    %442 = vmatmul.mubr.f32.gmra.mrb[0].mxu0 %v297
    %v443 = vpop.f32.mrb[0].mxu0
    %v444 = vadd.f32 %v369, %v443
    %v445 = vpop.f32.mrb[0].mxu0
    %446 = vmatprep.mubr.f32.mxu0 0.0
    %447 = vmatmul.mubr.f32.gmra.mrb[0].mxu0 %v300
    %v448 = vpop.f32.mrb[0].mxu0
    %v449 = vadd.f32 %v374, %v448
    %v450 = vpop.f32.mrb[0].mxu0
    %451 = vdwg.mxu0
    %v452 = vsel %vm241, %v444, 0.0
    %453 = vadd.xlane.f32.xlu0 %v452
    %v454 = vpop.xlane.xlu0 %453
    %v455 = vsel %vm241, %v449, 0.0
    %456 = vadd.xlane.f32.xlu0 %v455
    %v457 = vpop.xlane.xlu0 %456
    %v458 = vrcp.pop 64.0
    %v459 = vmul.f32 %v454, %v458
    %v460 = vmul.f32 %v457, %v458
    %v461 = vsub.f32 %v444, %v459
    %v462 = vsub.f32 %v449, %v460
    %v463 = vmul.f32 %v461, %v461
    %v464 = vmul.f32 %v462, %v462
    %v465 = vsel %vm241, %v463, 0.0
    %466 = vadd.xlane.f32.xlu0 %v465
    %v467 = vpop.xlane.xlu0 %466
    %v468 = vsel %vm241, %v464, 0.0
    %469 = vadd.xlane.f32.xlu0 %v468
    %v470 = vpop.xlane.xlu0 %469
    %v471 = vmul.f32 %v467, %v458
    %v472 = vmul.f32 %v470, %v458
    %v473 = vadd.f32 %v471, 1e-05
    %v474 = vadd.f32 %v472, 1e-05
    %v475 = vrsqrt.pop %v473
    %v476 = vrsqrt.pop %v474
    %v477 = vmul.f32 %v461, %v475
    %v478 = vmul.f32 %v462, %v476
    %v479 = vld [vmem:[%s5] sm:$0x1]
    %v481 = vlaneseq
    %v482 = vshrl.u32 %v481, 7
    %v483 = vsub.s32 0, %v482
    %v484 = vrot.slane %v479, %v483
    %v486 = vmul.f32 %v477, %v484
    %v487 = vmul.f32 %v478, %v484
    %v488 = vld [vmem:[%s6] sm:$0x1]
    %v490 = vlaneseq
    %v491 = vshrl.u32 %v490, 7
    %v492 = vsub.s32 0, %v491
    %v493 = vrot.slane %v488, %v492
    %v495 = vadd.f32 %v486, %v493
    %v496 = vadd.f32 %v487, %v493
    %v497 = vsub.f32 %v495, -2.0
    %v498 = vsub.f32 %v496, -2.0
    %v499 = vmul.f32 %v497, 1.75
    %v500 = vmul.f32 %v498, 1.75
    %v501 = vmul.f32 %v499, %v499
    %v502 = vmul.f32 %v500, %v500
    %v503 = vsub.f32 0.0, %v501
    %v504 = vsub.f32 0.0, %v502
    %v505 = vmul.f32 %v503, 1.442695
    %v506 = vpow.pop %v505
    %v507 = vmul.f32 %v504, 1.442695
    %v508 = vpow.pop %v507
    %v509 = vsub.f32 %v495, -1.4285715
    %v510 = vsub.f32 %v496, -1.4285715
    %v511 = vmul.f32 %v509, 1.75
    %v512 = vmul.f32 %v510, 1.75
    %v513 = vmul.f32 %v511, %v511
    %v514 = vmul.f32 %v512, %v512
    %v515 = vsub.f32 0.0, %v513
    %v516 = vsub.f32 0.0, %v514
    %v517 = vmul.f32 %v515, 1.442695
    %v518 = vpow.pop %v517
    %v519 = vmul.f32 %v516, 1.442695
    %v520 = vpow.pop %v519
    %v521 = vsub.f32 %v495, -0.85714287
    %v522 = vsub.f32 %v496, -0.85714287
    %v523 = vmul.f32 %v521, 1.75
    %v524 = vmul.f32 %v522, 1.75
    %v525 = vmul.f32 %v523, %v523
    %v526 = vmul.f32 %v524, %v524
    %v527 = vsub.f32 0.0, %v525
    %v528 = vsub.f32 0.0, %v526
    %v529 = vmul.f32 %v527, 1.442695
    %v530 = vpow.pop %v529
    %v531 = vmul.f32 %v528, 1.442695
    %v532 = vpow.pop %v531
    %v533 = vsub.f32 %v495, -0.2857143
    %v534 = vsub.f32 %v496, -0.2857143
    %v535 = vmul.f32 %v533, 1.75
    %v536 = vmul.f32 %v534, 1.75
    %v537 = vmul.f32 %v535, %v535
    %v538 = vmul.f32 %v536, %v536
    %v539 = vsub.f32 0.0, %v537
    %v540 = vsub.f32 0.0, %v538
    %v541 = vmul.f32 %v539, 1.442695
    %v542 = vpow.pop %v541
    %v543 = vmul.f32 %v540, 1.442695
    %v544 = vpow.pop %v543
    %v545 = vsub.f32 %v495, 0.2857143
    %v546 = vsub.f32 %v496, 0.2857143
    %v547 = vmul.f32 %v545, 1.75
    %v548 = vmul.f32 %v546, 1.75
    %v549 = vmul.f32 %v547, %v547
    %v550 = vmul.f32 %v548, %v548
    %v551 = vsub.f32 0.0, %v549
    %v552 = vsub.f32 0.0, %v550
    %v553 = vmul.f32 %v551, 1.442695
    %v554 = vpow.pop %v553
    %v555 = vmul.f32 %v552, 1.442695
    %v556 = vpow.pop %v555
    %v557 = vsub.f32 %v495, 0.85714287
    %v558 = vsub.f32 %v496, 0.85714287
    %v559 = vmul.f32 %v557, 1.75
    %v560 = vmul.f32 %v558, 1.75
    %v561 = vmul.f32 %v559, %v559
    %v562 = vmul.f32 %v560, %v560
    %v563 = vsub.f32 0.0, %v561
    %v564 = vsub.f32 0.0, %v562
    %v565 = vmul.f32 %v563, 1.442695
    %v566 = vpow.pop %v565
    %v567 = vmul.f32 %v564, 1.442695
    %v568 = vpow.pop %v567
    %v569 = vsub.f32 %v495, 1.4285715
    %v570 = vsub.f32 %v496, 1.4285715
    %v571 = vmul.f32 %v569, 1.75
    %v572 = vmul.f32 %v570, 1.75
    %v573 = vmul.f32 %v571, %v571
    %v574 = vmul.f32 %v572, %v572
    %v575 = vsub.f32 0.0, %v573
    %v576 = vsub.f32 0.0, %v574
    %v577 = vmul.f32 %v575, 1.442695
    %v578 = vpow.pop %v577
    %v579 = vmul.f32 %v576, 1.442695
    %v580 = vpow.pop %v579
    %v581 = vsub.f32 %v495, 2.0
    %v582 = vsub.f32 %v496, 2.0
    %v583 = vmul.f32 %v581, 1.75
    %v584 = vmul.f32 %v582, 1.75
    %v585 = vmul.f32 %v583, %v583
    %v586 = vmul.f32 %v584, %v584
    %v587 = vsub.f32 0.0, %v585
    %v588 = vsub.f32 0.0, %v586
    %v589 = vmul.f32 %v587, 1.442695
    %v590 = vpow.pop %v589
    %v591 = vmul.f32 %v588, 1.442695
    %v592 = vpow.pop %v591
    %v593 = vxor.u32 %v444, 2147483648
    %v594 = vxor.u32 %v449, 2147483648
    %v595 = vmul.f32 %v593, 1.442695
    %v596 = vpow.pop %v595
    %v597 = vmul.f32 %v594, 1.442695
    %v598 = vpow.pop %v597
    %v599 = vadd.f32 %v596, 1.0
    %v600 = vadd.f32 %v598, 1.0
    %v601 = vrcp.pop %v599
    %v602 = vmul.f32 1.0, %v601
    %v603 = vrcp.pop %v600
    %v604 = vmul.f32 1.0, %v603
    %v605 = vmul.f32 %v444, %v602
    %v606 = vmul.f32 %v449, %v604
    %609 = vrot.lane.b32.xlu0 %v518, 64
    %v610 = vpop.permute.xlu0 %609
    %611 = vrot.lane.b32.xlu0 %v520, 64
    %v612 = vpop.permute.xlu0 %611
    %617 = vrot.lane.b32.xlu0 %v542, 64
    %v618 = vpop.permute.xlu0 %617
    %619 = vrot.lane.b32.xlu0 %v544, 64
    %v620 = vpop.permute.xlu0 %619
    %625 = vrot.lane.b32.xlu0 %v566, 64
    %v626 = vpop.permute.xlu0 %625
    %627 = vrot.lane.b32.xlu0 %v568, 64
    %v628 = vpop.permute.xlu0 %627
    %633 = vrot.lane.b32.xlu0 %v590, 64
    %v634 = vpop.permute.xlu0 %633
    %635 = vrot.lane.b32.xlu0 %v592, 64
    %v636 = vpop.permute.xlu0 %635
    %v639 = vsel %vm241, %v506, %v610
    %v640 = vsel %vm241, %v508, %v612
    %v641 = vsel %vm241, %v530, %v618
    %v642 = vsel %vm241, %v532, %v620
    %v643 = vsel %vm241, %v554, %v626
    %v644 = vsel %vm241, %v556, %v628
    %v645 = vsel %vm241, %v578, %v634
    %v646 = vsel %vm241, %v580, %v636
    %v647 = vld [vmem:[%s7] sm:$0xff]
    %v648 = vld [vmem:[%s7 + $0x8] sm:$0xff]
    %v649 = vld [vmem:[%s7 + $0x10] sm:$0xff]
    %v650 = vld [vmem:[%s7 + $0x18] sm:$0xff]
    %v651 = vld [vmem:[%s7 + $0x20] sm:$0xff]
    %v652 = vld [vmem:[%s7 + $0x28] sm:$0xff]
    %v653 = vld [vmem:[%s7 + $0x30] sm:$0xff]
    %v654 = vld [vmem:[%s7 + $0x38] sm:$0xff]
    %v655 = vld [vmem:[%s7 + $0x40] sm:$0xff]
    %v656 = vld [vmem:[%s7 + $0x48] sm:$0xff]
    %v657 = vld [vmem:[%s7 + $0x50] sm:$0xff]
    %v658 = vld [vmem:[%s7 + $0x58] sm:$0xff]
    %v659 = vld [vmem:[%s7 + $0x60] sm:$0xff]
    %v660 = vld [vmem:[%s7 + $0x68] sm:$0xff]
    %v661 = vld [vmem:[%s7 + $0x70] sm:$0xff]
    %v662 = vld [vmem:[%s7 + $0x78] sm:$0xff]
    %v663 = vld [vmem:[%s7 + $0x80] sm:$0xff]
    %v664 = vld [vmem:[%s7 + $0x88] sm:$0xff]
    %v665 = vld [vmem:[%s7 + $0x90] sm:$0xff]
    %v666 = vld [vmem:[%s7 + $0x98] sm:$0xff]
    %v667 = vld [vmem:[%s7 + $0xa0] sm:$0xff]
    %v668 = vld [vmem:[%s7 + $0xa8] sm:$0xff]
    %v669 = vld [vmem:[%s7 + $0xb0] sm:$0xff]
    %v670 = vld [vmem:[%s7 + $0xb8] sm:$0xff]
    %v671 = vld [vmem:[%s7 + $0xc0] sm:$0xff]
    %v672 = vld [vmem:[%s7 + $0xc8] sm:$0xff]
    %v673 = vld [vmem:[%s7 + $0xd0] sm:$0xff]
    %v674 = vld [vmem:[%s7 + $0xd8] sm:$0xff]
    %v675 = vld [vmem:[%s7 + $0xe0] sm:$0xff]
    %v676 = vld [vmem:[%s7 + $0xe8] sm:$0xff]
    %v677 = vld [vmem:[%s7 + $0xf0] sm:$0xff]
    %v678 = vld [vmem:[%s7 + $0xf8] sm:$0xff]
    %v679 = vld [vmem:[%s7 + $0x100] sm:$0xff]
    %v680 = vld [vmem:[%s7 + $0x108] sm:$0xff]
    %v681 = vld [vmem:[%s7 + $0x110] sm:$0xff]
    %v682 = vld [vmem:[%s7 + $0x118] sm:$0xff]
    %v683 = vld [vmem:[%s7 + $0x120] sm:$0xff]
    %v684 = vld [vmem:[%s7 + $0x128] sm:$0xff]
    %v685 = vld [vmem:[%s7 + $0x130] sm:$0xff]
    %v686 = vld [vmem:[%s7 + $0x138] sm:$0xff]
    %v687 = vld [vmem:[%s7 + $0x140] sm:$0xff]
    %v688 = vld [vmem:[%s7 + $0x148] sm:$0xff]
    %v689 = vld [vmem:[%s7 + $0x150] sm:$0xff]
    %v690 = vld [vmem:[%s7 + $0x158] sm:$0xff]
    %v691 = vld [vmem:[%s7 + $0x160] sm:$0xff]
    %v692 = vld [vmem:[%s7 + $0x168] sm:$0xff]
    %v693 = vld [vmem:[%s7 + $0x170] sm:$0xff]
    %v694 = vld [vmem:[%s7 + $0x178] sm:$0xff]
    %v695 = vld [vmem:[%s7 + $0x180] sm:$0xff]
    %v696 = vld [vmem:[%s7 + $0x188] sm:$0xff]
    %v697 = vld [vmem:[%s7 + $0x190] sm:$0xff]
    %v698 = vld [vmem:[%s7 + $0x198] sm:$0xff]
    %v699 = vld [vmem:[%s7 + $0x1a0] sm:$0xff]
    %v700 = vld [vmem:[%s7 + $0x1a8] sm:$0xff]
    %v701 = vld [vmem:[%s7 + $0x1b0] sm:$0xff]
    %v702 = vld [vmem:[%s7 + $0x1b8] sm:$0xff]
    %v703 = vld [vmem:[%s7 + $0x1c0] sm:$0xff]
    %v704 = vld [vmem:[%s7 + $0x1c8] sm:$0xff]
    %v705 = vld [vmem:[%s7 + $0x1d0] sm:$0xff]
    %v706 = vld [vmem:[%s7 + $0x1d8] sm:$0xff]
    %v707 = vld [vmem:[%s7 + $0x1e0] sm:$0xff]
    %v708 = vld [vmem:[%s7 + $0x1e8] sm:$0xff]
    %v709 = vld [vmem:[%s7 + $0x1f0] sm:$0xff]
    %v710 = vld [vmem:[%s7 + $0x1f8] sm:$0xff]
    %v711 = vld [vmem:[%s7 + $0x200] sm:$0xff]
    %v712 = vld [vmem:[%s7 + $0x208] sm:$0xff]
    %v713 = vld [vmem:[%s7 + $0x210] sm:$0xff]
    %v714 = vld [vmem:[%s7 + $0x218] sm:$0xff]
    %v715 = vld [vmem:[%s7 + $0x220] sm:$0xff]
    %v716 = vld [vmem:[%s7 + $0x228] sm:$0xff]
    %v717 = vld [vmem:[%s7 + $0x230] sm:$0xff]
    %v718 = vld [vmem:[%s7 + $0x238] sm:$0xff]
    %v719 = vld [vmem:[%s8] sm:$0x1]
    %v721 = vlaneseq
    %v722 = vshrl.u32 %v721, 7
    %v723 = vsub.s32 0, %v722
    %v724 = vrot.slane %v719, %v723
    %v727 = vsel %vm241, %v605, 0
    %v730 = vsel %vm241, %v606, 0
    %732 = vmatprep.subr.mxu0 0.0
    %733 = vmatpush1.msra.mxu0 %v647
    %734 = vmatprep.subr.mxu0 0.0
    %735 = vmatpush1.msra.mxu0 %v648
    %736 = vmatprep.subr.mxu0 0.0
    %737 = vmatpush1.msra.mxu0 %v649
    %738 = vmatprep.subr.mxu0 0.0
    %739 = vmatpush1.msra.mxu0 %v650
    %740 = vmatprep.subr.mxu0 0.0
    %741 = vmatpush1.msra.mxu0 %v651
    %742 = vmatprep.subr.mxu0 0.0
    %743 = vmatpush1.msra.mxu0 %v652
    %744 = vmatprep.subr.mxu0 0.0
    %745 = vmatpush1.msra.mxu0 %v653
    %746 = vmatprep.subr.mxu0 0.0
    %747 = vmatpush1.msra.mxu0 %v654
    %748 = vmatprep.subr.mxu0 0.0
    %749 = vmatpush1.msra.mxu0 %v655
    %750 = vmatprep.subr.mxu0 0.0
    %751 = vmatpush1.msra.mxu0 %v656
    %752 = vmatprep.subr.mxu0 0.0
    %753 = vmatpush1.msra.mxu0 %v657
    %754 = vmatprep.subr.mxu0 0.0
    %755 = vmatpush1.msra.mxu0 %v658
    %756 = vmatprep.subr.mxu0 0.0
    %757 = vmatpush1.msra.mxu0 %v659
    %758 = vmatprep.subr.mxu0 0.0
    %759 = vmatpush1.msra.mxu0 %v660
    %760 = vmatprep.subr.mxu0 0.0
    %761 = vmatpush1.msra.mxu0 %v661
    %762 = vmatprep.subr.mxu0 0.0
    %763 = vmatpush1.msra.mxu0 %v662
    %764 = vmatprep.subr.mxu0 0.0
    %765 = vmatpush1.msra.mxu0 %v663
    %766 = vmatprep.subr.mxu0 0.0
    %767 = vmatpush1.msra.mxu0 %v664
    %768 = vmatprep.subr.mxu0 0.0
    %769 = vmatpush1.msra.mxu0 %v665
    %770 = vmatprep.subr.mxu0 0.0
    %771 = vmatpush1.msra.mxu0 %v666
    %772 = vmatprep.subr.mxu0 0.0
    %773 = vmatpush1.msra.mxu0 %v667
    %774 = vmatprep.subr.mxu0 0.0
    %775 = vmatpush1.msra.mxu0 %v668
    %776 = vmatprep.subr.mxu0 0.0
    %777 = vmatpush1.msra.mxu0 %v669
    %778 = vmatprep.subr.mxu0 0.0
    %779 = vmatpush1.msra.mxu0 %v670
    %780 = vmatprep.subr.mxu0 0.0
    %781 = vmatpush1.msra.mxu0 %v671
    %782 = vmatprep.subr.mxu0 0.0
    %783 = vmatpush1.msra.mxu0 %v672
    %784 = vmatprep.subr.mxu0 0.0
    %785 = vmatpush1.msra.mxu0 %v673
    %786 = vmatprep.subr.mxu0 0.0
    %787 = vmatpush1.msra.mxu0 %v674
    %788 = vmatprep.subr.mxu0 0.0
    %789 = vmatpush1.msra.mxu0 %v675
    %790 = vmatprep.subr.mxu0 0.0
    %791 = vmatpush1.msra.mxu0 %v676
    %792 = vmatprep.subr.mxu0 0.0
    %793 = vmatpush1.msra.mxu0 %v677
    %794 = vmatprep.subr.mxu0 0.0
    %795 = vmatpush1.msra.mxu0 %v678
    %796 = vmatprep.mubr.f32.mxu0 %v641
    %797 = vmatmul.mubr.f32.gmra.mrb[0].mxu0 %v639
    %v798 = vpop.f32.mrb[0].mxu0
    %v799 = vadd.f32 %v724, %v798
    %v800 = vpop.f32.mrb[0].mxu0
    %801 = vmatprep.mubr.f32.mxu0 %v642
    %802 = vmatmul.mubr.f32.gmra.mrb[0].mxu0 %v640
    %v803 = vpop.f32.mrb[0].mxu0
    %v804 = vadd.f32 %v724, %v803
    %v805 = vpop.f32.mrb[0].mxu0
    %806 = vdwg.mxu0
    %807 = vmatprep.subr.mxu0 0.0
    %808 = vmatpush1.msra.mxu0 %v679
    %809 = vmatprep.subr.mxu0 0.0
    %810 = vmatpush1.msra.mxu0 %v680
    %811 = vmatprep.subr.mxu0 0.0
    %812 = vmatpush1.msra.mxu0 %v681
    %813 = vmatprep.subr.mxu0 0.0
    %814 = vmatpush1.msra.mxu0 %v682
    %815 = vmatprep.subr.mxu0 0.0
    %816 = vmatpush1.msra.mxu0 %v683
    %817 = vmatprep.subr.mxu0 0.0
    %818 = vmatpush1.msra.mxu0 %v684
    %819 = vmatprep.subr.mxu0 0.0
    %820 = vmatpush1.msra.mxu0 %v685
    %821 = vmatprep.subr.mxu0 0.0
    %822 = vmatpush1.msra.mxu0 %v686
    %823 = vmatprep.subr.mxu0 0.0
    %824 = vmatpush1.msra.mxu0 %v687
    %825 = vmatprep.subr.mxu0 0.0
    %826 = vmatpush1.msra.mxu0 %v688
    %827 = vmatprep.subr.mxu0 0.0
    %828 = vmatpush1.msra.mxu0 %v689
    %829 = vmatprep.subr.mxu0 0.0
    %830 = vmatpush1.msra.mxu0 %v690
    %831 = vmatprep.subr.mxu0 0.0
    %832 = vmatpush1.msra.mxu0 %v691
    %833 = vmatprep.subr.mxu0 0.0
    %834 = vmatpush1.msra.mxu0 %v692
    %835 = vmatprep.subr.mxu0 0.0
    %836 = vmatpush1.msra.mxu0 %v693
    %837 = vmatprep.subr.mxu0 0.0
    %838 = vmatpush1.msra.mxu0 %v694
    %839 = vmatprep.subr.mxu0 0.0
    %840 = vmatpush1.msra.mxu0 %v695
    %841 = vmatprep.subr.mxu0 0.0
    %842 = vmatpush1.msra.mxu0 %v696
    %843 = vmatprep.subr.mxu0 0.0
    %844 = vmatpush1.msra.mxu0 %v697
    %845 = vmatprep.subr.mxu0 0.0
    %846 = vmatpush1.msra.mxu0 %v698
    %847 = vmatprep.subr.mxu0 0.0
    %848 = vmatpush1.msra.mxu0 %v699
    %849 = vmatprep.subr.mxu0 0.0
    %850 = vmatpush1.msra.mxu0 %v700
    %851 = vmatprep.subr.mxu0 0.0
    %852 = vmatpush1.msra.mxu0 %v701
    %853 = vmatprep.subr.mxu0 0.0
    %854 = vmatpush1.msra.mxu0 %v702
    %855 = vmatprep.subr.mxu0 0.0
    %856 = vmatpush1.msra.mxu0 %v703
    %857 = vmatprep.subr.mxu0 0.0
    %858 = vmatpush1.msra.mxu0 %v704
    %859 = vmatprep.subr.mxu0 0.0
    %860 = vmatpush1.msra.mxu0 %v705
    %861 = vmatprep.subr.mxu0 0.0
    %862 = vmatpush1.msra.mxu0 %v706
    %863 = vmatprep.subr.mxu0 0.0
    %864 = vmatpush1.msra.mxu0 %v707
    %865 = vmatprep.subr.mxu0 0.0
    %866 = vmatpush1.msra.mxu0 %v708
    %867 = vmatprep.subr.mxu0 0.0
    %868 = vmatpush1.msra.mxu0 %v709
    %869 = vmatprep.subr.mxu0 0.0
    %870 = vmatpush1.msra.mxu0 %v710
    %871 = vmatprep.mubr.f32.mxu0 %v645
    %872 = vmatmul.mubr.f32.gmra.mrb[0].mxu0 %v643
    %v873 = vpop.f32.mrb[0].mxu0
    %v874 = vadd.f32 %v799, %v873
    %v875 = vpop.f32.mrb[0].mxu0
    %876 = vmatprep.mubr.f32.mxu0 %v646
    %877 = vmatmul.mubr.f32.gmra.mrb[0].mxu0 %v644
    %v878 = vpop.f32.mrb[0].mxu0
    %v879 = vadd.f32 %v804, %v878
    %v880 = vpop.f32.mrb[0].mxu0
    %881 = vdwg.mxu0
    %882 = vmatprep.subr.mxu0 0.0
    %883 = vmatpush1.msra.mxu0 %v711
    %884 = vmatprep.subr.mxu0 0.0
    %885 = vmatpush1.msra.mxu0 %v712
    %886 = vmatprep.subr.mxu0 0.0
    %887 = vmatpush1.msra.mxu0 %v713
    %888 = vmatprep.subr.mxu0 0.0
    %889 = vmatpush1.msra.mxu0 %v714
    %890 = vmatprep.subr.mxu0 0.0
    %891 = vmatpush1.msra.mxu0 %v715
    %892 = vmatprep.subr.mxu0 0.0
    %893 = vmatpush1.msra.mxu0 %v716
    %894 = vmatprep.subr.mxu0 0.0
    %895 = vmatpush1.msra.mxu0 %v717
    %896 = vmatprep.subr.mxu0 0.0
    %897 = vmatpush1.msra.mxu0 %v718
    %898 = vmatprep.subr.mxu0 0.0
    %899 = vmatpush1.msra.mxu0 0.0
    %900 = vmatprep.subr.mxu0 0.0
    %901 = vmatpush1.msra.mxu0 0.0
    %902 = vmatprep.subr.mxu0 0.0
    %903 = vmatpush1.msra.mxu0 0.0
    %904 = vmatprep.subr.mxu0 0.0
    %905 = vmatpush1.msra.mxu0 0.0
    %906 = vmatprep.subr.mxu0 0.0
    %907 = vmatpush1.msra.mxu0 0.0
    %908 = vmatprep.subr.mxu0 0.0
    %909 = vmatpush1.msra.mxu0 0.0
    %910 = vmatprep.subr.mxu0 0.0
    %911 = vmatpush1.msra.mxu0 0.0
    %912 = vmatprep.subr.mxu0 0.0
    %913 = vmatpush1.msra.mxu0 0.0
    %914 = vmatprep.subr.mxu0 0.0
    %915 = vmatpush1.msra.mxu0 0.0
    %916 = vmatprep.subr.mxu0 0.0
    %917 = vmatpush1.msra.mxu0 0.0
    %918 = vmatprep.subr.mxu0 0.0
    %919 = vmatpush1.msra.mxu0 0.0
    %920 = vmatprep.subr.mxu0 0.0
    %921 = vmatpush1.msra.mxu0 0.0
    %922 = vmatprep.subr.mxu0 0.0
    %923 = vmatpush1.msra.mxu0 0.0
    %924 = vmatprep.subr.mxu0 0.0
    %925 = vmatpush1.msra.mxu0 0.0
    %926 = vmatprep.subr.mxu0 0.0
    %927 = vmatpush1.msra.mxu0 0.0
    %928 = vmatprep.subr.mxu0 0.0
    %929 = vmatpush1.msra.mxu0 0.0
    %930 = vmatprep.subr.mxu0 0.0
    %931 = vmatpush1.msra.mxu0 0.0
    %932 = vmatprep.subr.mxu0 0.0
    %933 = vmatpush1.msra.mxu0 0.0
    %934 = vmatprep.subr.mxu0 0.0
    %935 = vmatpush1.msra.mxu0 0.0
    %936 = vmatprep.subr.mxu0 0.0
    %937 = vmatpush1.msra.mxu0 0.0
    %938 = vmatprep.subr.mxu0 0.0
    %939 = vmatpush1.msra.mxu0 0.0
    %940 = vmatprep.subr.mxu0 0.0
    %941 = vmatpush1.msra.mxu0 0.0
    %942 = vmatprep.subr.mxu0 0.0
    %943 = vmatpush1.msra.mxu0 0.0
    %944 = vmatprep.subr.mxu0 0.0
    %945 = vmatpush1.msra.mxu0 0.0
    %946 = vmatprep.mubr.f32.mxu0 0.0
    %947 = vmatmul.mubr.f32.gmra.mrb[0].mxu0 %v727
    %v948 = vpop.f32.mrb[0].mxu0
    %v949 = vadd.f32 %v874, %v948
    %v950 = vpop.f32.mrb[0].mxu0
    %951 = vmatprep.mubr.f32.mxu0 0.0
    %952 = vmatmul.mubr.f32.gmra.mrb[0].mxu0 %v730
    %v953 = vpop.f32.mrb[0].mxu0
    %v954 = vadd.f32 %v879, %v953
    %v955 = vpop.f32.mrb[0].mxu0
    %956 = vdwg.mxu0
    %vm957 = vcmask 130048
    %958 = vst.msk [vmem:[#allocation2] sm:$0xff] %vm957, %v949
    %959 = vst.msk [vmem:[#allocation2 + $0x8] sm:$0xff] %vm957, %v954
    // Predicated region
    $region38: #{tpu_custom_call.1} parent=1 // pred_check
      _
    $region39: #{tpu_custom_call.1} parent=1 // pred_check_branch
      %961 = sbr.rel (0) target = $region41
    $region40: #{tpu_custom_call.1} parent=1 // pred_region
      %s963 = ssub.s32 256, 256
      %964 = vsyncadd [#allocation3], %s963
      %s965 = sshll.u32 [#allocation2], 4
      %s966 = int_to_ptr.vmem [resolvable:$true] %s965
      %971 = dma.vmem_to_hbm [thread:$0]  %s966, 256, %s9, [#allocation3], 128, 128, 8
    $region41: #{tpu_custom_call.1} parent=1 // pred_fallthru
      _
    // Predicated region
    $region42: #{tpu_custom_call.1} parent=1 // pred_check
      _
    $region43: #{tpu_custom_call.1} parent=1 // pred_check_branch
      %973 = sbr.rel (0) target = $region45
    $region44: #{tpu_custom_call.1} parent=1 // pred_region
      %974 = dma.done [#allocation3], 256
    $region45: #{tpu_custom_call.1} parent=1 // pred_fallthru
      _
    %975 = vsyncpa [#allocation3], 1

</llo_original>
